<compile_context>
chip_gen: v7x
topology: tpu7x:2x2x1
jax: 0.10.0
libtpu: 0.0.40
codegen_flags: <defaults>
</compile_context>

<pallas_src>
import functools

import jax
import jax.numpy as jnp
from jax.experimental import pallas as pl
from jax.experimental.pallas import tpu as pltpu

# Conv2d_normal defaults
IN_CHANNELS = 3
OUT_CHANNELS = 16
KERNEL_SIZE = 3
STRIDE = (1, 1)        # module default [1, 1]; kernel below assumes stride 1
USE_RELU = True        # activation_fn=True
# TODO(synk): BatchNorm2d path (bn=True) not implemented (module default is bn=False).


def _conv_batch_kernel(x_ref, w_ref, b_ref, o_ref, *, n, h_out, ksize):
    """Whole-batch VALID conv + bias + ReLU in one invocation.

    x_ref: (N, H, W*Cin)            input rows with (W, Cin) flattened on lanes
    w_ref: (K, W*Cin, W_out*Cout)   per-kh expanded weight (im2col in weights)
    b_ref: (1, W_out*Cout)          bias tiled over W_out
    o_ref: (N, H_out, W_out*Cout)   lane-dense output (minor dim multiple of 128)
    """
    wo_co = o_ref.shape[-1]
    k = x_ref.shape[-1]

    def rows(kh):
        # (N, H_out, W*Cin) -> (N*H_out, W*Cin): merges leading dims only
        # (minor/lane dim unchanged, sublane dim is a multiple of 8).
        return x_ref[:, kh:kh + h_out, :].astype(jnp.float32).reshape(n * h_out, k)

    # kh = 0 initializes the accumulator; bias folded into the same add.
    acc = jnp.dot(rows(0), w_ref[0], preferred_element_type=jnp.float32) + b_ref[...]
    for kh in range(1, ksize):                                   # static unroll, 3 taps
        acc = acc + jnp.dot(rows(kh), w_ref[kh],
                            preferred_element_type=jnp.float32)
    if USE_RELU:
        acc = jnp.maximum(acc, 0.0)
    o_ref[...] = acc.reshape(n, h_out, wo_co).astype(o_ref.dtype)


def prepare_conv2d_normal_params(w_oihw, b, d1, d2):
    """One-time expansion of the conv weight/bias (hoisted out of forward).

    Because the torch module permutes (0,3,2,1) before and after the conv, a
    VALID conv applied directly to the (N, d1, d2, Cin) tensor with the 3x3
    weight spatially transposed (kh<->kw) yields exactly the torch output in
    its final ordering.  The kw sliding window is additionally baked into the
    weight ("im2col in weight space"):
        w_big[a, iw*Cin+ci, wo*Cout+co] = w[co, ci, iw-wo, a]   if 0 <= iw-wo < K
                                          0                     otherwise
    so the kernel is 3 lane-dense matmuls (one per a = tap along d1).
    """
    assert STRIDE == (1, 1), "kernel implements the module's default stride [1,1]"
    cout, cin, kh, kw = w_oihw.shape
    W = d2
    w_out = W - kw + 1

    # (Cout, Cin, KH, KW) -> [a, b, ci, co] with a along d1, b along d2
    # (this is both the HWIO relayout and the spatial kh<->kw transpose).
    w_hwio = jnp.transpose(w_oihw, (3, 2, 1, 0)).astype(jnp.float32)   # (K, K, Cin, Cout)

    iw_idx = jnp.arange(W)
    wo_idx = jnp.arange(w_out)
    rel = iw_idx[:, None] - wo_idx[None, :]                            # (W, W_out)
    valid = (rel >= 0) & (rel < kw)
    rel_c = jnp.clip(rel, 0, kw - 1)
    big = w_hwio[:, rel_c, :, :]                                       # (K, W, W_out, Cin, Cout)
    big = jnp.where(valid[None, :, :, None, None], big, 0.0)
    w_big = jnp.transpose(big, (0, 1, 3, 2, 4)).reshape(kh, W * cin, w_out * cout)

    b_big = jnp.tile(b.astype(jnp.float32), w_out).reshape(1, w_out * cout)
    return w_big, b_big


@jax.jit
def conv2d_normal_forward(x, w_big, b_big):
    """Matches Conv2d_normal.forward (with precomputed expanded params).

    x:     (N, d1, d2, Cin)
    w_big: (K, d2*Cin, (d2-K+1)*Cout)   from prepare_conv2d_normal_params
    b_big: (1, (d2-K+1)*Cout)
    returns (N, d1-K+1, d2-K+1, Cout)
    """
    n, d1, d2, cin = x.shape
    ksize = w_big.shape[0]
    wo_co = w_big.shape[2]
    h_out = d1 - ksize + 1
    w_out = d2 - ksize + 1
    cout = wo_co // w_out

    x_flat = x.reshape(n, d1, d2 * cin)          # merge minor dims only (cheap)

    kernel = functools.partial(_conv_batch_kernel, n=n, h_out=h_out, ksize=ksize)

    y = pl.pallas_call(
        kernel,
        out_shape=jax.ShapeDtypeStruct((n, h_out, wo_co), x.dtype),
        grid=(1,),
        in_specs=[
            pl.BlockSpec((n, d1, d2 * cin), lambda i: (0, 0, 0)),
            pl.BlockSpec((ksize, d2 * cin, wo_co), lambda i: (0, 0, 0)),
            pl.BlockSpec((1, wo_co), lambda i: (0, 0)),
        ],
        out_specs=pl.BlockSpec((n, h_out, wo_co), lambda i: (0, 0, 0)),
        compiler_params=pltpu.CompilerParams(
            dimension_semantics=("arbitrary",)),
    )(x_flat, w_big, b_big)

    # already in torch's final (N, d1-2, d2-2, Cout) ordering -- no transpose
    return y.reshape(n, h_out, w_out, cout)


if __name__ == "__main__":
    key = jax.random.PRNGKey(0)
    kx, kw_key, kb_key = jax.random.split(key, 3)

    N, D1, D2 = 2, 18, 18
    x = jax.random.normal(kx, (N, D1, D2, IN_CHANNELS), dtype=jnp.float32)

    # deterministic parameter init (torch-style uniform bound = 1/sqrt(fan_in))
    fan_in = IN_CHANNELS * KERNEL_SIZE * KERNEL_SIZE
    bound = 1.0 / (fan_in ** 0.5)
    w = jax.random.uniform(
        kw_key, (OUT_CHANNELS, IN_CHANNELS, KERNEL_SIZE, KERNEL_SIZE),
        minval=-bound, maxval=bound, dtype=jnp.float32)
    b = jax.random.uniform(
        kb_key, (OUT_CHANNELS,), minval=-bound, maxval=bound, dtype=jnp.float32)

    # One-time parameter expansion (hoisted out of the per-call path).
    w_big, b_big = prepare_conv2d_normal_params(w, b, D1, D2)
    w_big = jax.block_until_ready(w_big)
    b_big = jax.block_until_ready(b_big)

    out = jax.block_until_ready(conv2d_normal_forward(x, w_big, b_big))

    # pure-JAX reference of the exact torch semantics
    x_nhwc = jnp.transpose(x, (0, 2, 1, 3))                      # NCHW conv with H=D2, W=D1
    w_hwio = jnp.transpose(w, (2, 3, 1, 0))
    ref = jax.lax.conv_general_dilated(
        x_nhwc, w_hwio, window_strides=STRIDE, padding="VALID",
        dimension_numbers=("NHWC", "HWIO", "NHWC"))
    ref = jnp.maximum(ref + b[None, None, None, :], 0.0)
    ref = jnp.transpose(ref, (0, 2, 1, 3))

    assert out.shape == (N, D1 - KERNEL_SIZE + 1, D2 - KERNEL_SIZE + 1, OUT_CHANNELS)
    assert jnp.allclose(out, ref, atol=1e-5, rtol=1e-5)
    print("KERNEL_OK")
</pallas_src>

<mosaic_0001>
module attributes {stable_mosaic.version = 11 : i64} {
  func.func @_conv_batch_kernel(%arg0: i32, %arg1: memref<2x18x54xf32, #tpu.memory_space<vmem>>, %arg2: memref<3x54x256xf32, #tpu.memory_space<vmem>>, %arg3: memref<1x256xf32, #tpu.memory_space<vmem>>, %arg4: memref<2x16x256xf32, #tpu.memory_space<vmem>>) attributes {dimension_semantics = [#tpu.dimension_semantics<arbitrary>], iteration_bounds = array<i64: 1>, scalar_prefetch = 0 : i64, scratch_operands = 0 : i64, tpu.core_type = #tpu.core_type<tc>, window_params = [{pipeline_mode = #tpu.pipeline_mode<synchronous>, transform_indices = @transform_0, window_bounds = array<i64: 2, 18, 54>}, {pipeline_mode = #tpu.pipeline_mode<synchronous>, transform_indices = @transform_1, window_bounds = array<i64: 3, 54, 256>}, {pipeline_mode = #tpu.pipeline_mode<synchronous>, transform_indices = @transform_2, window_bounds = array<i64: 1, 256>}, {pipeline_mode = #tpu.pipeline_mode<synchronous>, transform_indices = @transform_3, window_bounds = array<i64: 2, 16, 256>}]} {
    %c0 = arith.constant 0 : index
    %c0_0 = arith.constant 0 : index
    %c0_1 = arith.constant 0 : index
    %0 = vector.load %arg1[%c0, %c0_0, %c0_1] : memref<2x18x54xf32, #tpu.memory_space<vmem>>, vector<2x16x54xf32>
    %1 = vector.shape_cast %0 : vector<2x16x54xf32> to vector<32x54xf32>
    %c0_2 = arith.constant 0 : index
    %c0_3 = arith.constant 0 : index
    %c0_4 = arith.constant 0 : index
    %2 = vector.load %arg2[%c0_2, %c0_3, %c0_4] : memref<3x54x256xf32, #tpu.memory_space<vmem>>, vector<1x54x256xf32>
    %3 = vector.shape_cast %2 : vector<1x54x256xf32> to vector<54x256xf32>
    %cst = arith.constant dense<0.000000e+00> : vector<32x256xf32>
    %4 = tpu.matmul %1, %3, %cst {dimension_numbers = #tpu.dot_dimension_numbers<[1], [0], [0], [1], [0, 0, 1, 1], [], []>} : vector<32x54xf32>, vector<54x256xf32>, vector<32x256xf32> -> vector<32x256xf32>
    %c0_5 = arith.constant 0 : index
    %c0_6 = arith.constant 0 : index
    %5 = vector.load %arg3[%c0_5, %c0_6] : memref<1x256xf32, #tpu.memory_space<vmem>>, vector<1x256xf32>
    %6 = vector.broadcast %5 : vector<1x256xf32> to vector<32x256xf32>
    %7 = arith.addf %4, %6 : vector<32x256xf32>
    %c0_7 = arith.constant 0 : index
    %c1 = arith.constant 1 : index
    %c0_8 = arith.constant 0 : index
    %8 = vector.load %arg1[%c0_7, %c1, %c0_8] : memref<2x18x54xf32, #tpu.memory_space<vmem>>, vector<2x16x54xf32>
    %9 = vector.shape_cast %8 : vector<2x16x54xf32> to vector<32x54xf32>
    %c1_9 = arith.constant 1 : index
    %c0_10 = arith.constant 0 : index
    %c0_11 = arith.constant 0 : index
    %10 = vector.load %arg2[%c1_9, %c0_10, %c0_11] : memref<3x54x256xf32, #tpu.memory_space<vmem>>, vector<1x54x256xf32>
    %11 = vector.shape_cast %10 : vector<1x54x256xf32> to vector<54x256xf32>
    %cst_12 = arith.constant dense<0.000000e+00> : vector<32x256xf32>
    %12 = tpu.matmul %9, %11, %cst_12 {dimension_numbers = #tpu.dot_dimension_numbers<[1], [0], [0], [1], [0, 0, 1, 1], [], []>} : vector<32x54xf32>, vector<54x256xf32>, vector<32x256xf32> -> vector<32x256xf32>
    %13 = arith.addf %7, %12 : vector<32x256xf32>
    %c0_13 = arith.constant 0 : index
    %c2 = arith.constant 2 : index
    %c0_14 = arith.constant 0 : index
    %14 = vector.load %arg1[%c0_13, %c2, %c0_14] : memref<2x18x54xf32, #tpu.memory_space<vmem>>, vector<2x16x54xf32>
    %15 = vector.shape_cast %14 : vector<2x16x54xf32> to vector<32x54xf32>
    %c2_15 = arith.constant 2 : index
    %c0_16 = arith.constant 0 : index
    %c0_17 = arith.constant 0 : index
    %16 = vector.load %arg2[%c2_15, %c0_16, %c0_17] : memref<3x54x256xf32, #tpu.memory_space<vmem>>, vector<1x54x256xf32>
    %17 = vector.shape_cast %16 : vector<1x54x256xf32> to vector<54x256xf32>
    %cst_18 = arith.constant dense<0.000000e+00> : vector<32x256xf32>
    %18 = tpu.matmul %15, %17, %cst_18 {dimension_numbers = #tpu.dot_dimension_numbers<[1], [0], [0], [1], [0, 0, 1, 1], [], []>} : vector<32x54xf32>, vector<54x256xf32>, vector<32x256xf32> -> vector<32x256xf32>
    %19 = arith.addf %13, %18 : vector<32x256xf32>
    %cst_19 = arith.constant 0.000000e+00 : f32
    %20 = vector.broadcast %cst_19 : f32 to vector<32x256xf32>
    %21 = arith.maximumf %19, %20 : vector<32x256xf32>
    %22 = vector.shape_cast %21 : vector<32x256xf32> to vector<2x16x256xf32>
    %c0_20 = arith.constant 0 : index
    %c0_21 = arith.constant 0 : index
    %c0_22 = arith.constant 0 : index
    %23 = vector.load %arg4[%c0_20, %c0_21, %c0_22] : memref<2x16x256xf32, #tpu.memory_space<vmem>>, vector<2x16x256xf32>
    tpu.vector_store %arg4[%c0_20, %c0_21, %c0_22], %22 {strides = array<i32>} : memref<2x16x256xf32, #tpu.memory_space<vmem>>, vector<2x16x256xf32>,
    return
  }
  func.func @transform_0(%arg0: i32) -> (i32, i32, i32) {
    %c0_i32 = arith.constant 0 : i32
    %c0_i32_0 = arith.constant 0 : i32
    %c0_i32_1 = arith.constant 0 : i32
    %c0_i32_2 = arith.constant 0 : i32
    return %c0_i32, %c0_i32_0, %c0_i32_1 : i32, i32, i32
  }
  func.func @transform_1(%arg0: i32) -> (i32, i32, i32) {
    %c0_i32 = arith.constant 0 : i32
    %c0_i32_0 = arith.constant 0 : i32
    %c0_i32_1 = arith.constant 0 : i32
    %c0_i32_2 = arith.constant 0 : i32
    return %c0_i32, %c0_i32_0, %c0_i32_1 : i32, i32, i32
  }
  func.func @transform_2(%arg0: i32) -> (i32, i32) {
    %c0_i32 = arith.constant 0 : i32
    %c0_i32_0 = arith.constant 0 : i32
    %c0_i32_1 = arith.constant 0 : i32
    return %c0_i32, %c0_i32_0 : i32, i32
  }
  func.func @transform_3(%arg0: i32) -> (i32, i32, i32) {
    %c0_i32 = arith.constant 0 : i32
    %c0_i32_0 = arith.constant 0 : i32
    %c0_i32_1 = arith.constant 0 : i32
    %c0_i32_2 = arith.constant 0 : i32
    return %c0_i32, %c0_i32_0, %c0_i32_1 : i32, i32, i32
  }
}

</mosaic_0001>

<llo_original>
// kernel: conv2d_normal_forward.1
$region0: #{conv2d_normal_forward.1}
  #allocation0 [shape = 'u32[]', space=smem, size = 0x4, offset = 0x4, fixed_abs, tag = 'smem constant byte address 0x4 - core index']
  #allocation1 [shape = 'u32[144,128]{1,0:T(1,128)}', space=vmem, size = 0x12000, scoped, tag = 'internal scratch']
  %s0 = inlined_call_operand.vmem [shape: f32[2,18,54], index: 0, kind: input, shape index: {}]
  %s1 = inlined_call_operand.vmem [shape: f32[3,54,256], index: 1, kind: input, shape index: {}]
  %s2 = inlined_call_operand.vmem [shape: f32[1,256], index: 2, kind: input, shape index: {}]
  %s3 = inlined_call_operand.vmem [shape: f32[2,16,256], index: 3, kind: output, shape index: {}]
  %s4 = sld [smem:[#allocation0]]
  $region22: #{conv2d_normal_forward.1} parent=0
    _
  %s6 = ssub.s32 1, %s4
  %s7 = scalar_select 0, %s6, %s4
  // Predicated region
  $region2: #{conv2d_normal_forward.1} parent=0 // pred_check
    _
  $region3: #{conv2d_normal_forward.1} parent=0 // pred_check_branch
    %9 = sbr.rel (0) target = $region5
  $region4: #{conv2d_normal_forward.1} parent=0 // pred_region
    _
  $region5: #{conv2d_normal_forward.1} parent=0 // pred_fallthru
    _
  // Predicated region
  $region6: #{conv2d_normal_forward.1} parent=0 // pred_check
    _
  $region7: #{conv2d_normal_forward.1} parent=0 // pred_check_branch
    %11 = sbr.rel (0) target = $region9
  $region8: #{conv2d_normal_forward.1} parent=0 // pred_region
    _
  $region9: #{conv2d_normal_forward.1} parent=0 // pred_fallthru
    _
  // Predicated region
  $region10: #{conv2d_normal_forward.1} parent=0 // pred_check
    _
  $region11: #{conv2d_normal_forward.1} parent=0 // pred_check_branch
    %13 = sbr.rel (0) target = $region13
  $region12: #{conv2d_normal_forward.1} parent=0 // pred_region
    _
  $region13: #{conv2d_normal_forward.1} parent=0 // pred_fallthru
    _
  %v14 = vld [vmem:[%s0] sm:$0xff]
  %v15 = vld [vmem:[%s0 + $0x8] sm:$0xff]
  %v16 = vld [vmem:[%s0 + $0x18] sm:$0xff]
  %v17 = vld [vmem:[%s0 + $0x20] sm:$0xff]
  %v18 = vld [vmem:[%s1] sm:$0xff]
  %v19 = vld [vmem:[%s1 + $0x8] sm:$0xff]
  %v20 = vld [vmem:[%s1 + $0x10] sm:$0xff]
  %v21 = vld [vmem:[%s1 + $0x18] sm:$0xff]
  %v22 = vld [vmem:[%s1 + $0x20] sm:$0xff]
  %v23 = vld [vmem:[%s1 + $0x28] sm:$0xff]
  %v24 = vld [vmem:[%s1 + $0x30] sm:$0xff]
  %v25 = vld [vmem:[%s1 + $0x38] sm:$0xff]
  %v26 = vld [vmem:[%s1 + $0x40] sm:$0xff]
  %v27 = vld [vmem:[%s1 + $0x48] sm:$0xff]
  %v28 = vld [vmem:[%s1 + $0x50] sm:$0xff]
  %v29 = vld [vmem:[%s1 + $0x58] sm:$0xff]
  %v30 = vld [vmem:[%s1 + $0x60] sm:$0x3f]
  %v31 = vld [vmem:[%s1 + $0x68] sm:$0x3f]
  %v32 = vld [vmem:[%s2] sm:$0x3]
  %v34 = vlaneseq
  %v35 = vshrl.u32 %v34, 7
  %v36 = vsub.s32 0, %v35
  %v37 = vrot.slane %v32, %v36
  %v38 = vlaneseq
  %v39 = vshrl.u32 %v38, 7
  %v40 = vsub.s32 1, %v39
  %v41 = vrot.slane %v32, %v40
  %vm44 = vcmask 441344
  %v46 = vsel %vm44, %v14, 0
  %v49 = vsel %vm44, %v15, 0
  %v52 = vsel %vm44, %v16, 0
  %v55 = vsel %vm44, %v17, 0
  %vm57 = vcmask 1045504
  %v59 = vsel %vm57, %v30, 0
  %v62 = vsel %vm57, %v31, 0
  %64 = vmatprep.subr.mxu0 %v19
  %65 = vmatpush1.msra.mxu0 %v18
  %66 = vmatprep.subr.mxu0 %v21
  %67 = vmatpush1.msra.mxu0 %v20
  %68 = vmatprep.subr.mxu0 %v23
  %69 = vmatpush1.msra.mxu0 %v22
  %70 = vmatprep.subr.mxu0 %v25
  %71 = vmatpush1.msra.mxu0 %v24
  %72 = vmatprep.subr.mxu0 %v27
  %73 = vmatpush1.msra.mxu0 %v26
  %74 = vmatprep.subr.mxu0 %v29
  %75 = vmatpush1.msra.mxu0 %v28
  %76 = vmatprep.subr.mxu0 %v62
  %77 = vmatpush1.msra.mxu0 %v59
  %78 = vmatprep.subr.mxu0 0.0
  %79 = vmatpush1.msra.mxu0 0.0
  %80 = vmatprep.subr.mxu0 0.0
  %81 = vmatpush1.msra.mxu0 0.0
  %82 = vmatprep.subr.mxu0 0.0
  %83 = vmatpush1.msra.mxu0 0.0
  %84 = vmatprep.subr.mxu0 0.0
  %85 = vmatpush1.msra.mxu0 0.0
  %86 = vmatprep.subr.mxu0 0.0
  %87 = vmatpush1.msra.mxu0 0.0
  %88 = vmatprep.subr.mxu0 0.0
  %89 = vmatpush1.msra.mxu0 0.0
  %90 = vmatprep.subr.mxu0 0.0
  %91 = vmatpush1.msra.mxu0 0.0
  %92 = vmatprep.subr.mxu0 0.0
  %93 = vmatpush1.msra.mxu0 0.0
  %94 = vmatprep.subr.mxu0 0.0
  %95 = vmatpush1.msra.mxu0 0.0
  %96 = vmatprep.subr.mxu0 0.0
  %97 = vmatpush1.msra.mxu0 0.0
  %98 = vmatprep.subr.mxu0 0.0
  %99 = vmatpush1.msra.mxu0 0.0
  %100 = vmatprep.subr.mxu0 0.0
  %101 = vmatpush1.msra.mxu0 0.0
  %102 = vmatprep.subr.mxu0 0.0
  %103 = vmatpush1.msra.mxu0 0.0
  %104 = vmatprep.subr.mxu0 0.0
  %105 = vmatpush1.msra.mxu0 0.0
  %106 = vmatprep.subr.mxu0 0.0
  %107 = vmatpush1.msra.mxu0 0.0
  %108 = vmatprep.subr.mxu0 0.0
  %109 = vmatpush1.msra.mxu0 0.0
  %110 = vmatprep.subr.mxu0 0.0
  %111 = vmatpush1.msra.mxu0 0.0
  %112 = vmatprep.subr.mxu0 0.0
  %113 = vmatpush1.msra.mxu0 0.0
  %114 = vmatprep.subr.mxu0 0.0
  %115 = vmatpush1.msra.mxu0 0.0
  %116 = vmatprep.subr.mxu0 0.0
  %117 = vmatpush1.msra.mxu0 0.0
  %118 = vmatprep.subr.mxu0 0.0
  %119 = vmatpush1.msra.mxu0 0.0
  %120 = vmatprep.subr.mxu0 0.0
  %121 = vmatpush1.msra.mxu0 0.0
  %122 = vmatprep.subr.mxu0 0.0
  %123 = vmatpush1.msra.mxu0 0.0
  %124 = vmatprep.subr.mxu0 0.0
  %125 = vmatpush1.msra.mxu0 0.0
  %126 = vmatprep.subr.mxu0 0.0
  %127 = vmatpush1.msra.mxu0 0.0
  %128 = vmatprep.mubr.f32.mxu0 0.0
  %129 = vmatmul.mubr.f32.gmra.mrb[0].mxu0 %v46
  %v130 = vpop.f32.mrb[0].mxu0
  %v131 = vadd.f32 %v37, %v130
  %v132 = vpop.f32.mrb[0].mxu0
  %v133 = vadd.f32 %v41, %v132
  %134 = vmatprep.mubr.f32.mxu0 0.0
  %135 = vmatmul.mubr.f32.gmra.mrb[0].mxu0 %v49
  %v136 = vpop.f32.mrb[0].mxu0
  %v137 = vadd.f32 %v37, %v136
  %v138 = vpop.f32.mrb[0].mxu0
  %v139 = vadd.f32 %v41, %v138
  %140 = vmatprep.mubr.f32.mxu0 0.0
  %141 = vmatmul.mubr.f32.gmra.mrb[0].mxu0 %v52
  %v142 = vpop.f32.mrb[0].mxu0
  %v143 = vadd.f32 %v37, %v142
  %v144 = vpop.f32.mrb[0].mxu0
  %v145 = vadd.f32 %v41, %v144
  %146 = vmatprep.mubr.f32.mxu0 0.0
  %147 = vmatmul.mubr.f32.gmra.mrb[0].mxu0 %v55
  %v148 = vpop.f32.mrb[0].mxu0
  %v149 = vadd.f32 %v37, %v148
  %v150 = vpop.f32.mrb[0].mxu0
  %v151 = vadd.f32 %v41, %v150
  %152 = vdwg.mxu0
  %v153 = vld [vmem:[%s0 + $0x1] sm:$0xff]
  %v154 = vld [vmem:[%s0 + $0x9] sm:$0xff]
  %v155 = vld [vmem:[%s0 + $0x19] sm:$0xff]
  %v156 = vld [vmem:[%s0 + $0x21] sm:$0xff]
  %s157 = scalar_lea.vmem %s1, 112
  %v158 = vld [vmem:[%s157] sm:$0xff]
  %v159 = vld [vmem:[%s157 + $0x8] sm:$0xff]
  %v160 = vld [vmem:[%s157 + $0x10] sm:$0xff]
  %v161 = vld [vmem:[%s157 + $0x18] sm:$0xff]
  %v162 = vld [vmem:[%s157 + $0x20] sm:$0xff]
  %v163 = vld [vmem:[%s157 + $0x28] sm:$0xff]
  %v164 = vld [vmem:[%s157 + $0x30] sm:$0xff]
  %v165 = vld [vmem:[%s157 + $0x38] sm:$0xff]
  %v166 = vld [vmem:[%s157 + $0x40] sm:$0xff]
  %v167 = vld [vmem:[%s157 + $0x48] sm:$0xff]
  %v168 = vld [vmem:[%s157 + $0x50] sm:$0xff]
  %v169 = vld [vmem:[%s157 + $0x58] sm:$0xff]
  %v170 = vld [vmem:[%s157 + $0x60] sm:$0x3f]
  %v171 = vld [vmem:[%s157 + $0x68] sm:$0x3f]
  %v173 = vsel %vm44, %v153, 0
  %v176 = vsel %vm44, %v154, 0
  %v179 = vsel %vm44, %v155, 0
  %v182 = vsel %vm44, %v156, 0
  %v185 = vsel %vm57, %v170, 0
  %v188 = vsel %vm57, %v171, 0
  %190 = vmatprep.subr.mxu0 %v159
  %191 = vmatpush1.msra.mxu0 %v158
  %192 = vmatprep.subr.mxu0 %v161
  %193 = vmatpush1.msra.mxu0 %v160
  %194 = vmatprep.subr.mxu0 %v163
  %195 = vmatpush1.msra.mxu0 %v162
  %196 = vmatprep.subr.mxu0 %v165
  %197 = vmatpush1.msra.mxu0 %v164
  %198 = vmatprep.subr.mxu0 %v167
  %199 = vmatpush1.msra.mxu0 %v166
  %200 = vmatprep.subr.mxu0 %v169
  %201 = vmatpush1.msra.mxu0 %v168
  %202 = vmatprep.subr.mxu0 %v188
  %203 = vmatpush1.msra.mxu0 %v185
  %204 = vmatprep.subr.mxu0 0.0
  %205 = vmatpush1.msra.mxu0 0.0
  %206 = vmatprep.subr.mxu0 0.0
  %207 = vmatpush1.msra.mxu0 0.0
  %208 = vmatprep.subr.mxu0 0.0
  %209 = vmatpush1.msra.mxu0 0.0
  %210 = vmatprep.subr.mxu0 0.0
  %211 = vmatpush1.msra.mxu0 0.0
  %212 = vmatprep.subr.mxu0 0.0
  %213 = vmatpush1.msra.mxu0 0.0
  %214 = vmatprep.subr.mxu0 0.0
  %215 = vmatpush1.msra.mxu0 0.0
  %216 = vmatprep.subr.mxu0 0.0
  %217 = vmatpush1.msra.mxu0 0.0
  %218 = vmatprep.subr.mxu0 0.0
  %219 = vmatpush1.msra.mxu0 0.0
  %220 = vmatprep.subr.mxu0 0.0
  %221 = vmatpush1.msra.mxu0 0.0
  %222 = vmatprep.subr.mxu0 0.0
  %223 = vmatpush1.msra.mxu0 0.0
  %224 = vmatprep.subr.mxu0 0.0
  %225 = vmatpush1.msra.mxu0 0.0
  %226 = vmatprep.subr.mxu0 0.0
  %227 = vmatpush1.msra.mxu0 0.0
  %228 = vmatprep.subr.mxu0 0.0
  %229 = vmatpush1.msra.mxu0 0.0
  %230 = vmatprep.subr.mxu0 0.0
  %231 = vmatpush1.msra.mxu0 0.0
  %232 = vmatprep.subr.mxu0 0.0
  %233 = vmatpush1.msra.mxu0 0.0
  %234 = vmatprep.subr.mxu0 0.0
  %235 = vmatpush1.msra.mxu0 0.0
  %236 = vmatprep.subr.mxu0 0.0
  %237 = vmatpush1.msra.mxu0 0.0
  %238 = vmatprep.subr.mxu0 0.0
  %239 = vmatpush1.msra.mxu0 0.0
  %240 = vmatprep.subr.mxu0 0.0
  %241 = vmatpush1.msra.mxu0 0.0
  %242 = vmatprep.subr.mxu0 0.0
  %243 = vmatpush1.msra.mxu0 0.0
  %244 = vmatprep.subr.mxu0 0.0
  %245 = vmatpush1.msra.mxu0 0.0
  %246 = vmatprep.subr.mxu0 0.0
  %247 = vmatpush1.msra.mxu0 0.0
  %248 = vmatprep.subr.mxu0 0.0
  %249 = vmatpush1.msra.mxu0 0.0
  %250 = vmatprep.subr.mxu0 0.0
  %251 = vmatpush1.msra.mxu0 0.0
  %252 = vmatprep.subr.mxu0 0.0
  %253 = vmatpush1.msra.mxu0 0.0
  %254 = vmatprep.mubr.f32.mxu0 0.0
  %255 = vmatmul.mubr.f32.gmra.mrb[0].mxu0 %v173
  %v256 = vpop.f32.mrb[0].mxu0
  %v257 = vadd.f32 0.0, %v256
  %v258 = vpop.f32.mrb[0].mxu0
  %v259 = vadd.f32 0.0, %v258
  %260 = vmatprep.mubr.f32.mxu0 0.0
  %261 = vmatmul.mubr.f32.gmra.mrb[0].mxu0 %v176
  %v262 = vpop.f32.mrb[0].mxu0
  %v263 = vadd.f32 0.0, %v262
  %v264 = vpop.f32.mrb[0].mxu0
  %v265 = vadd.f32 0.0, %v264
  %266 = vmatprep.mubr.f32.mxu0 0.0
  %267 = vmatmul.mubr.f32.gmra.mrb[0].mxu0 %v179
  %v268 = vpop.f32.mrb[0].mxu0
  %v269 = vadd.f32 0.0, %v268
  %v270 = vpop.f32.mrb[0].mxu0
  %v271 = vadd.f32 0.0, %v270
  %272 = vmatprep.mubr.f32.mxu0 0.0
  %273 = vmatmul.mubr.f32.gmra.mrb[0].mxu0 %v182
  %v274 = vpop.f32.mrb[0].mxu0
  %v275 = vadd.f32 0.0, %v274
  %v276 = vpop.f32.mrb[0].mxu0
  %v277 = vadd.f32 0.0, %v276
  %278 = vdwg.mxu0
  %v279 = vadd.f32 %v131, %v257
  %v280 = vadd.f32 %v133, %v259
  %v281 = vadd.f32 %v137, %v263
  %v282 = vadd.f32 %v139, %v265
  %v283 = vadd.f32 %v143, %v269
  %v284 = vadd.f32 %v145, %v271
  %v285 = vadd.f32 %v149, %v275
  %v286 = vadd.f32 %v151, %v277
  %v287 = vld [vmem:[%s0 + $0x2] sm:$0xff]
  %v288 = vld [vmem:[%s0 + $0xa] sm:$0xff]
  %v289 = vld [vmem:[%s0 + $0x1a] sm:$0xff]
  %v290 = vld [vmem:[%s0 + $0x22] sm:$0xff]
  %s291 = scalar_lea.vmem %s1, 224
  %v292 = vld [vmem:[%s291] sm:$0xff]
  %v293 = vld [vmem:[%s291 + $0x8] sm:$0xff]
  %v294 = vld [vmem:[%s291 + $0x10] sm:$0xff]
  %v295 = vld [vmem:[%s291 + $0x18] sm:$0xff]
  %v296 = vld [vmem:[%s291 + $0x20] sm:$0xff]
  %v297 = vld [vmem:[%s291 + $0x28] sm:$0xff]
  %v298 = vld [vmem:[%s291 + $0x30] sm:$0xff]
  %v299 = vld [vmem:[%s291 + $0x38] sm:$0xff]
  %v300 = vld [vmem:[%s291 + $0x40] sm:$0xff]
  %v301 = vld [vmem:[%s291 + $0x48] sm:$0xff]
  %v302 = vld [vmem:[%s291 + $0x50] sm:$0xff]
  %v303 = vld [vmem:[%s291 + $0x58] sm:$0xff]
  %v304 = vld [vmem:[%s291 + $0x60] sm:$0x3f]
  %v305 = vld [vmem:[%s291 + $0x68] sm:$0x3f]
  %v307 = vsel %vm44, %v287, 0
  %v310 = vsel %vm44, %v288, 0
  %v313 = vsel %vm44, %v289, 0
  %v316 = vsel %vm44, %v290, 0
  %v319 = vsel %vm57, %v304, 0
  %v322 = vsel %vm57, %v305, 0
  %324 = vmatprep.subr.mxu0 %v293
  %325 = vmatpush1.msra.mxu0 %v292
  %326 = vmatprep.subr.mxu0 %v295
  %327 = vmatpush1.msra.mxu0 %v294
  %328 = vmatprep.subr.mxu0 %v297
  %329 = vmatpush1.msra.mxu0 %v296
  %330 = vmatprep.subr.mxu0 %v299
  %331 = vmatpush1.msra.mxu0 %v298
  %332 = vmatprep.subr.mxu0 %v301
  %333 = vmatpush1.msra.mxu0 %v300
  %334 = vmatprep.subr.mxu0 %v303
  %335 = vmatpush1.msra.mxu0 %v302
  %336 = vmatprep.subr.mxu0 %v322
  %337 = vmatpush1.msra.mxu0 %v319
  %338 = vmatprep.subr.mxu0 0.0
  %339 = vmatpush1.msra.mxu0 0.0
  %340 = vmatprep.subr.mxu0 0.0
  %341 = vmatpush1.msra.mxu0 0.0
  %342 = vmatprep.subr.mxu0 0.0
  %343 = vmatpush1.msra.mxu0 0.0
  %344 = vmatprep.subr.mxu0 0.0
  %345 = vmatpush1.msra.mxu0 0.0
  %346 = vmatprep.subr.mxu0 0.0
  %347 = vmatpush1.msra.mxu0 0.0
  %348 = vmatprep.subr.mxu0 0.0
  %349 = vmatpush1.msra.mxu0 0.0
  %350 = vmatprep.subr.mxu0 0.0
  %351 = vmatpush1.msra.mxu0 0.0
  %352 = vmatprep.subr.mxu0 0.0
  %353 = vmatpush1.msra.mxu0 0.0
  %354 = vmatprep.subr.mxu0 0.0
  %355 = vmatpush1.msra.mxu0 0.0
  %356 = vmatprep.subr.mxu0 0.0
  %357 = vmatpush1.msra.mxu0 0.0
  %358 = vmatprep.subr.mxu0 0.0
  %359 = vmatpush1.msra.mxu0 0.0
  %360 = vmatprep.subr.mxu0 0.0
  %361 = vmatpush1.msra.mxu0 0.0
  %362 = vmatprep.subr.mxu0 0.0
  %363 = vmatpush1.msra.mxu0 0.0
  %364 = vmatprep.subr.mxu0 0.0
  %365 = vmatpush1.msra.mxu0 0.0
  %366 = vmatprep.subr.mxu0 0.0
  %367 = vmatpush1.msra.mxu0 0.0
  %368 = vmatprep.subr.mxu0 0.0
  %369 = vmatpush1.msra.mxu0 0.0
  %370 = vmatprep.subr.mxu0 0.0
  %371 = vmatpush1.msra.mxu0 0.0
  %372 = vmatprep.subr.mxu0 0.0
  %373 = vmatpush1.msra.mxu0 0.0
  %374 = vmatprep.subr.mxu0 0.0
  %375 = vmatpush1.msra.mxu0 0.0
  %376 = vmatprep.subr.mxu0 0.0
  %377 = vmatpush1.msra.mxu0 0.0
  %378 = vmatprep.subr.mxu0 0.0
  %379 = vmatpush1.msra.mxu0 0.0
  %380 = vmatprep.subr.mxu0 0.0
  %381 = vmatpush1.msra.mxu0 0.0
  %382 = vmatprep.subr.mxu0 0.0
  %383 = vmatpush1.msra.mxu0 0.0
  %384 = vmatprep.subr.mxu0 0.0
  %385 = vmatpush1.msra.mxu0 0.0
  %386 = vmatprep.subr.mxu0 0.0
  %387 = vmatpush1.msra.mxu0 0.0
  %388 = vmatprep.mubr.f32.mxu0 0.0
  %389 = vmatmul.mubr.f32.gmra.mrb[0].mxu0 %v307
  %v390 = vpop.f32.mrb[0].mxu0
  %v391 = vadd.f32 0.0, %v390
  %v392 = vpop.f32.mrb[0].mxu0
  %v393 = vadd.f32 0.0, %v392
  %394 = vmatprep.mubr.f32.mxu0 0.0
  %395 = vmatmul.mubr.f32.gmra.mrb[0].mxu0 %v310
  %v396 = vpop.f32.mrb[0].mxu0
  %v397 = vadd.f32 0.0, %v396
  %v398 = vpop.f32.mrb[0].mxu0
  %v399 = vadd.f32 0.0, %v398
  %400 = vmatprep.mubr.f32.mxu0 0.0
  %401 = vmatmul.mubr.f32.gmra.mrb[0].mxu0 %v313
  %v402 = vpop.f32.mrb[0].mxu0
  %v403 = vadd.f32 0.0, %v402
  %v404 = vpop.f32.mrb[0].mxu0
  %v405 = vadd.f32 0.0, %v404
  %406 = vmatprep.mubr.f32.mxu0 0.0
  %407 = vmatmul.mubr.f32.gmra.mrb[0].mxu0 %v316
  %v408 = vpop.f32.mrb[0].mxu0
  %v409 = vadd.f32 0.0, %v408
  %v410 = vpop.f32.mrb[0].mxu0
  %v411 = vadd.f32 0.0, %v410
  %412 = vdwg.mxu0
  %v413 = vadd.f32 %v279, %v391
  %v414 = vadd.f32 %v280, %v393
  %v415 = vadd.f32 %v281, %v397
  %v416 = vadd.f32 %v282, %v399
  %v417 = vadd.f32 %v283, %v403
  %v418 = vadd.f32 %v284, %v405
  %v419 = vadd.f32 %v285, %v409
  %v420 = vadd.f32 %v286, %v411
  %v421 = vmax.f32 %v413, 0.0
  %v422 = vmax.f32 %v414, 0.0
  %v423 = vmax.f32 %v415, 0.0
  %v424 = vmax.f32 %v416, 0.0
  %v425 = vmax.f32 %v417, 0.0
  %v426 = vmax.f32 %v418, 0.0
  %v427 = vmax.f32 %v419, 0.0
  %v428 = vmax.f32 %v420, 0.0
  %429 = vst [vmem:[%s3] sm:$0xff] %v421
  %430 = vst [vmem:[%s3 + $0x8] sm:$0xff] %v422
  %431 = vst [vmem:[%s3 + $0x10] sm:$0xff] %v423
  %432 = vst [vmem:[%s3 + $0x18] sm:$0xff] %v424
  %433 = vst [vmem:[%s3 + $0x20] sm:$0xff] %v425
  %434 = vst [vmem:[%s3 + $0x28] sm:$0xff] %v426
  %435 = vst [vmem:[%s3 + $0x30] sm:$0xff] %v427
  %436 = vst [vmem:[%s3 + $0x38] sm:$0xff] %v428
  // Predicated region
  $region14: #{conv2d_normal_forward.1} parent=0 // pred_check
    _
  $region15: #{conv2d_normal_forward.1} parent=0 // pred_check_branch
    %438 = sbr.rel (0) target = $region17
  $region16: #{conv2d_normal_forward.1} parent=0 // pred_region
    _
  $region17: #{conv2d_normal_forward.1} parent=0 // pred_fallthru
    _
  // Predicated region
  $region18: #{conv2d_normal_forward.1} parent=0 // pred_check
    _
  $region19: #{conv2d_normal_forward.1} parent=0 // pred_check_branch
    %440 = sbr.rel (0) target = $region21
  $region20: #{conv2d_normal_forward.1} parent=0 // pred_region
    _
  $region21: #{conv2d_normal_forward.1} parent=0 // pred_fallthru
    _

</llo_original>
